<compile_context>
chip_gen: v7x
topology: tpu7x:2x2x1
jax: 0.10.0
libtpu: 0.0.40
codegen_flags: <defaults>
</compile_context>

<pallas_src>
import jax
import jax.numpy as jnp
from jax.experimental import pallas as pl
from jax.experimental.pallas import tpu as pltpu


def _round_up(x: int, m: int) -> int:
    return ((x + m - 1) // m) * m


def policy_kernel(x_ref, w1_ref, b1_ref, w2_ref, b2_ref, out_ref):
    # ---- linear1 + ReLU (MXU + VPU, f32 elementwise) ----
    h = jnp.dot(x_ref[...], w1_ref[...], preferred_element_type=jnp.float32)
    h = jnp.maximum(h + b1_ref[...], 0.0)

    # ---- linear2 (MXU), narrow N = action_space ----
    s = jnp.dot(h.astype(w2_ref.dtype), w2_ref[...],
                preferred_element_type=jnp.float32)
    s = s + b2_ref[...]

    # ---- numerically stable softmax over the (unpadded) action dim ----
    m = jnp.max(s, axis=-1, keepdims=True)
    e = jnp.exp(s - m)
    denom = jnp.sum(e, axis=-1, keepdims=True)
    inv = pl.reciprocal(denom, approx=True)        # EUP vrcp (free co-issue slot)
    inv = inv * (2.0 - denom * inv)                # one Newton step -> full f32 accuracy
    out_ref[...] = (e * inv).astype(out_ref.dtype)


def policy_forward(x, w1, b1, w2, b2, *, batch_tile=1024, matmul_dtype=jnp.float32):
    """x: [B, num_inputs]; w1: [num_inputs, hidden]; w2: [hidden, action_space].

    Weights are stored pre-transposed ([in, out]) so the kernel computes x @ W + b.
    """
    B, K = x.shape
    H = w1.shape[1]
    A = w2.shape[1]

    # Only the hidden dim gets padded to a full 128-lane tile (activations on
    # it never touch HBM).  K and A stay unpadded -> minimal HBM traffic on
    # the bandwidth-dominant x / out arrays.
    H_pad = _round_up(H, 128)

    # Batch tile: multiple of 8 sublanes, capped at batch_tile, and chosen so
    # the grid has >=2 steps whenever the batch is big enough to split
    # (v7x megacore; harmless extra ~0.35us on single-TC v5e/v6e).
    B8 = _round_up(B, 8)
    bt = min(_round_up(batch_tile, 8), max(8, _round_up(pl.cdiv(B8, 2), 8)))
    B_pad = _round_up(B, bt)

    xp = jnp.pad(x, ((0, B_pad - B), (0, 0))).astype(matmul_dtype)
    w1p = jnp.pad(w1, ((0, 0), (0, H_pad - H))).astype(matmul_dtype)
    b1p = jnp.pad(b1.reshape(1, H).astype(jnp.float32), ((0, 0), (0, H_pad - H)))
    w2p = jnp.pad(w2, ((0, H_pad - H), (0, 0))).astype(matmul_dtype)
    b2p = b2.reshape(1, A).astype(jnp.float32)

    grid = (B_pad // bt,)

    # Honest scoped-VMEM budget: everything is double-buffered by default,
    # including the constant-index weights; intermediates are f32.
    wsize = jnp.dtype(matmul_dtype).itemsize
    vmem_bytes = (
        2 * wsize * (K * H_pad + H_pad * A)     # w1, w2 (double-buffered)
        + 2 * 4 * (H_pad + A)                   # b1, b2 (f32, double-buffered)
        + 2 * wsize * bt * K                    # double-buffered x tiles
        + 2 * 4 * bt * A                        # double-buffered out tiles
        + 4 * 4 * bt * max(H_pad, A)            # in-flight f32 intermediates
    )
    vmem_limit = int(min(max(vmem_bytes + (4 << 20), 16 << 20), 48 << 20))

    out_padded = pl.pallas_call(
        policy_kernel,
        out_shape=jax.ShapeDtypeStruct((B_pad, A), jnp.float32),
        grid_spec=pltpu.PrefetchScalarGridSpec(
            num_scalar_prefetch=0,
            grid=grid,
            in_specs=[
                pl.BlockSpec((bt, K), lambda i: (i, 0)),        # x: tiled over batch, K unpadded
                pl.BlockSpec((K, H_pad), lambda i: (0, 0)),     # w1: VMEM-resident
                pl.BlockSpec((1, H_pad), lambda i: (0, 0)),     # b1: VMEM-resident
                pl.BlockSpec((H_pad, A), lambda i: (0, 0)),     # w2: VMEM-resident
                pl.BlockSpec((1, A), lambda i: (0, 0)),         # b2: VMEM-resident
            ],
            out_specs=pl.BlockSpec((bt, A), lambda i: (i, 0)),  # narrow (A) output, no slice on A
        ),
        compiler_params=pltpu.CompilerParams(
            dimension_semantics=("parallel",),
            vmem_limit_bytes=vmem_limit,
        ),
    )(xp, w1p, b1p, w2p, b2p)

    return out_padded if B_pad == B else out_padded[:B]


def init_policy_params(key, num_inputs, hidden_size, action_space):
    """Deterministic init mirroring nn.Linear's uniform(-1/sqrt(fan_in), +...)."""
    k1, k2, k3, k4 = jax.random.split(key, 4)
    bound1 = 1.0 / jnp.sqrt(num_inputs)
    bound2 = 1.0 / jnp.sqrt(hidden_size)
    # Stored already transposed to [in, out] for the kernel.
    w1 = jax.random.uniform(k1, (num_inputs, hidden_size), jnp.float32, -bound1, bound1)
    b1 = jax.random.uniform(k2, (1, hidden_size), jnp.float32, -bound1, bound1)
    w2 = jax.random.uniform(k3, (hidden_size, action_space), jnp.float32, -bound2, bound2)
    b2 = jax.random.uniform(k4, (1, action_space), jnp.float32, -bound2, bound2)
    return w1, b1, w2, b2


def reference_forward(x, w1, b1, w2, b2):
    h = jnp.maximum(x @ w1 + b1, 0.0)
    s = h @ w2 + b2
    return jax.nn.softmax(s, axis=-1)


if __name__ == "__main__":
    num_inputs = 16
    hidden_size = 32
    action_space = 8

    key = jax.random.PRNGKey(0)
    kx, kx2, kx3, kp = jax.random.split(key, 4)
    w1, b1, w2, b2 = init_policy_params(kp, num_inputs, hidden_size, action_space)

    # jit the wrapper so params stay device-resident and launch cost is amortized.
    forward = jax.jit(policy_forward, static_argnames=("batch_tile", "matmul_dtype"))

    # --- small single-tile case (grid = 1, batch padded 4 -> 8) ---
    batch = 4
    x = jax.random.normal(kx, (batch, num_inputs), dtype=jnp.float32)
    out = jax.block_until_ready(forward(x, w1, b1, w2, b2))
    ref = reference_forward(x, w1, b1, w2, b2)
    assert out.shape == (batch, action_space)
    assert jnp.allclose(out, ref, atol=1e-5, rtol=1e-5)
    assert jnp.allclose(jnp.sum(out, axis=-1), 1.0, atol=1e-5)

    # --- batched case exercising a multi-step "parallel" batch grid (grid = 4) ---
    batch2 = 64
    x2 = jax.random.normal(kx2, (batch2, num_inputs), dtype=jnp.float32)
    out2 = jax.block_until_ready(forward(x2, w1, b1, w2, b2, batch_tile=16))
    ref2 = reference_forward(x2, w1, b1, w2, b2)
    assert out2.shape == (batch2, action_space)
    assert jnp.allclose(out2, ref2, atol=1e-5, rtol=1e-5)
    assert jnp.allclose(jnp.sum(out2, axis=-1), 1.0, atol=1e-5)

    # --- ragged batch (exercises batch padding + trailing slice, grid = 2) ---
    batch3 = 20
    x3 = jax.random.normal(kx3, (batch3, num_inputs), dtype=jnp.float32)
    out3 = jax.block_until_ready(forward(x3, w1, b1, w2, b2))
    ref3 = reference_forward(x3, w1, b1, w2, b2)
    assert out3.shape == (batch3, action_space)
    assert jnp.allclose(out3, ref3, atol=1e-5, rtol=1e-5)
    assert jnp.allclose(jnp.sum(out3, axis=-1), 1.0, atol=1e-5)

    print("KERNEL_OK")
</pallas_src>

<mosaic_0001>
module attributes {stable_mosaic.version = 11 : i64} {
  func.func @policy_kernel(%arg0: i32, %arg1: memref<8x16xf32, #tpu.memory_space<vmem>>, %arg2: memref<16x128xf32, #tpu.memory_space<vmem>>, %arg3: memref<1x128xf32, #tpu.memory_space<vmem>>, %arg4: memref<128x8xf32, #tpu.memory_space<vmem>>, %arg5: memref<1x8xf32, #tpu.memory_space<vmem>>, %arg6: memref<8x8xf32, #tpu.memory_space<vmem>>) attributes {dimension_semantics = [#tpu.dimension_semantics<parallel>], iteration_bounds = array<i64: 1>, scalar_prefetch = 0 : i64, scratch_operands = 0 : i64, tpu.core_type = #tpu.core_type<tc>, window_params = [{transform_indices = @transform_0, window_bounds = array<i64: 8, 16>}, {pipeline_mode = #tpu.pipeline_mode<synchronous>, transform_indices = @transform_1, window_bounds = array<i64: 16, 128>}, {pipeline_mode = #tpu.pipeline_mode<synchronous>, transform_indices = @transform_2, window_bounds = array<i64: 1, 128>}, {pipeline_mode = #tpu.pipeline_mode<synchronous>, transform_indices = @transform_3, window_bounds = array<i64: 128, 8>}, {pipeline_mode = #tpu.pipeline_mode<synchronous>, transform_indices = @transform_4, window_bounds = array<i64: 1, 8>}, {transform_indices = @transform_5, window_bounds = array<i64: 8, 8>}]} {
    %c0 = arith.constant 0 : index
    %c0_0 = arith.constant 0 : index
    %0 = vector.load %arg1[%c0, %c0_0] : memref<8x16xf32, #tpu.memory_space<vmem>>, vector<8x16xf32>
    %c0_1 = arith.constant 0 : index
    %c0_2 = arith.constant 0 : index
    %1 = vector.load %arg2[%c0_1, %c0_2] : memref<16x128xf32, #tpu.memory_space<vmem>>, vector<16x128xf32>
    %cst = arith.constant dense<0.000000e+00> : vector<8x128xf32>
    %2 = tpu.matmul %0, %1, %cst {dimension_numbers = #tpu.dot_dimension_numbers<[1], [0], [0], [1], [0, 0, 1, 1], [], []>} : vector<8x16xf32>, vector<16x128xf32>, vector<8x128xf32> -> vector<8x128xf32>
    %c0_3 = arith.constant 0 : index
    %c0_4 = arith.constant 0 : index
    %3 = vector.load %arg3[%c0_3, %c0_4] : memref<1x128xf32, #tpu.memory_space<vmem>>, vector<1x128xf32>
    %4 = vector.broadcast %3 : vector<1x128xf32> to vector<8x128xf32>
    %5 = arith.addf %2, %4 : vector<8x128xf32>
    %cst_5 = arith.constant 0.000000e+00 : f32
    %6 = vector.broadcast %cst_5 : f32 to vector<8x128xf32>
    %7 = arith.maximumf %5, %6 : vector<8x128xf32>
    %c0_6 = arith.constant 0 : index
    %c0_7 = arith.constant 0 : index
    %8 = vector.load %arg4[%c0_6, %c0_7] : memref<128x8xf32, #tpu.memory_space<vmem>>, vector<128x8xf32>
    %cst_8 = arith.constant dense<0.000000e+00> : vector<8x8xf32>
    %9 = tpu.matmul %7, %8, %cst_8 {dimension_numbers = #tpu.dot_dimension_numbers<[1], [0], [0], [1], [0, 0, 1, 1], [], []>} : vector<8x128xf32>, vector<128x8xf32>, vector<8x8xf32> -> vector<8x8xf32>
    %c0_9 = arith.constant 0 : index
    %c0_10 = arith.constant 0 : index
    %10 = vector.load %arg5[%c0_9, %c0_10] : memref<1x8xf32, #tpu.memory_space<vmem>>, vector<1x8xf32>
    %11 = vector.broadcast %10 : vector<1x8xf32> to vector<8x8xf32>
    %12 = arith.addf %9, %11 : vector<8x8xf32>
    %cst_11 = arith.constant dense<0xFF800000> : vector<8xf32>
    %13 = vector.multi_reduction <maximumf>, %12, %cst_11 [1] : vector<8x8xf32> to vector<8xf32>
    %14 = vector.shape_cast %13 : vector<8xf32> to vector<8x1xf32>
    %15 = vector.broadcast %14 : vector<8x1xf32> to vector<8x8xf32>
    %16 = arith.subf %12, %15 : vector<8x8xf32>
    %17 = math.exp %16 : vector<8x8xf32>
    %cst_12 = arith.constant dense<0.000000e+00> : vector<8xf32>
    %18 = vector.multi_reduction <add>, %17, %cst_12 [1] : vector<8x8xf32> to vector<8xf32>
    %19 = vector.shape_cast %18 : vector<8xf32> to vector<8x1xf32>
    %20 = tpu.reciprocal %19 {approx = true} : vector<8x1xf32> -> vector<8x1xf32>
    %21 = arith.mulf %19, %20 : vector<8x1xf32>
    %cst_13 = arith.constant 2.000000e+00 : f32
    %22 = vector.broadcast %cst_13 : f32 to vector<8x1xf32>
    %23 = arith.subf %22, %21 : vector<8x1xf32>
    %24 = arith.mulf %20, %23 : vector<8x1xf32>
    %25 = vector.broadcast %24 : vector<8x1xf32> to vector<8x8xf32>
    %26 = arith.mulf %17, %25 : vector<8x8xf32>
    %c0_14 = arith.constant 0 : index
    %c0_15 = arith.constant 0 : index
    %27 = vector.load %arg6[%c0_14, %c0_15] : memref<8x8xf32, #tpu.memory_space<vmem>>, vector<8x8xf32>
    tpu.vector_store %arg6[%c0_14, %c0_15], %26 {strides = array<i32>} : memref<8x8xf32, #tpu.memory_space<vmem>>, vector<8x8xf32>,
    return
  }
  func.func @transform_0(%arg0: i32) -> (i32, i32) {
    %c0_i32 = arith.constant 0 : i32
    %c0_i32_0 = arith.constant 0 : i32
    return %arg0, %c0_i32 : i32, i32
  }
  func.func @transform_1(%arg0: i32) -> (i32, i32) {
    %c0_i32 = arith.constant 0 : i32
    %c0_i32_0 = arith.constant 0 : i32
    %c0_i32_1 = arith.constant 0 : i32
    return %c0_i32, %c0_i32_0 : i32, i32
  }
  func.func @transform_2(%arg0: i32) -> (i32, i32) {
    %c0_i32 = arith.constant 0 : i32
    %c0_i32_0 = arith.constant 0 : i32
    %c0_i32_1 = arith.constant 0 : i32
    return %c0_i32, %c0_i32_0 : i32, i32
  }
  func.func @transform_3(%arg0: i32) -> (i32, i32) {
    %c0_i32 = arith.constant 0 : i32
    %c0_i32_0 = arith.constant 0 : i32
    %c0_i32_1 = arith.constant 0 : i32
    return %c0_i32, %c0_i32_0 : i32, i32
  }
  func.func @transform_4(%arg0: i32) -> (i32, i32) {
    %c0_i32 = arith.constant 0 : i32
    %c0_i32_0 = arith.constant 0 : i32
    %c0_i32_1 = arith.constant 0 : i32
    return %c0_i32, %c0_i32_0 : i32, i32
  }
  func.func @transform_5(%arg0: i32) -> (i32, i32) {
    %c0_i32 = arith.constant 0 : i32
    %c0_i32_0 = arith.constant 0 : i32
    return %arg0, %c0_i32 : i32, i32
  }
}

</mosaic_0001>

<llo_original>
// kernel: policy_forward.1
$region0: #{policy_forward.1}
  #allocation0 [shape = 'u32[]', space=smem, size = 0x4, offset = 0x4, fixed_abs, tag = 'smem constant byte address 0x4 - core index']
  #allocation1 [shape = 'u32[144,128]{1,0:T(1,128)}', space=vmem, size = 0x12000, scoped, tag = 'internal scratch']
  %s0 = inlined_call_operand.vmem [shape: f32[8,16], index: 0, kind: input, shape index: {}]
  %s1 = inlined_call_operand.vmem [shape: f32[16,128], index: 1, kind: input, shape index: {}]
  %s2 = inlined_call_operand.vmem [shape: f32[1,128], index: 2, kind: input, shape index: {}]
  %s3 = inlined_call_operand.vmem [shape: f32[128,8], index: 3, kind: input, shape index: {}]
  %s4 = inlined_call_operand.vmem [shape: f32[1,8], index: 4, kind: input, shape index: {}]
  %s5 = inlined_call_operand.vmem [shape: f32[8,8], index: 5, kind: output, shape index: {}]
  %s6 = sld [smem:[#allocation0]]
  $region30: #{policy_forward.1} parent=0
    _
  %s8 = ssub.s32 1, %s6
  %s9 = scalar_select 0, %s8, %s6
  // Predicated region
  $region2: #{policy_forward.1} parent=0 // pred_check
    _
  $region3: #{policy_forward.1} parent=0 // pred_check_branch
    %11 = sbr.rel (0) target = $region5
  $region4: #{policy_forward.1} parent=0 // pred_region
    _
  $region5: #{policy_forward.1} parent=0 // pred_fallthru
    _
  // Predicated region
  $region6: #{policy_forward.1} parent=0 // pred_check
    _
  $region7: #{policy_forward.1} parent=0 // pred_check_branch
    %13 = sbr.rel (0) target = $region9
  $region8: #{policy_forward.1} parent=0 // pred_region
    _
  $region9: #{policy_forward.1} parent=0 // pred_fallthru
    _
  // Predicated region
  $region10: #{policy_forward.1} parent=0 // pred_check
    _
  $region11: #{policy_forward.1} parent=0 // pred_check_branch
    %15 = sbr.rel (0) target = $region13
  $region12: #{policy_forward.1} parent=0 // pred_region
    _
  $region13: #{policy_forward.1} parent=0 // pred_fallthru
    _
  // Predicated region
  $region14: #{policy_forward.1} parent=0 // pred_check
    _
  $region15: #{policy_forward.1} parent=0 // pred_check_branch
    %17 = sbr.rel (0) target = $region17
  $region16: #{policy_forward.1} parent=0 // pred_region
    _
  $region17: #{policy_forward.1} parent=0 // pred_fallthru
    _
  // Predicated region
  $region18: #{policy_forward.1} parent=0 // pred_check
    _
  $region19: #{policy_forward.1} parent=0 // pred_check_branch
    %19 = sbr.rel (0) target = $region21
  $region20: #{policy_forward.1} parent=0 // pred_region
    _
  $region21: #{policy_forward.1} parent=0 // pred_fallthru
    _
  %v20 = vld [vmem:[%s0] sm:$0xff]
  %v21 = vld [vmem:[%s1] sm:$0xff]
  %v22 = vld [vmem:[%s1 + $0x8] sm:$0xff]
  %v23 = vld [vmem:[%s2] sm:$0x1]
  %v25 = vlaneseq
  %v26 = vshrl.u32 %v25, 7
  %v27 = vsub.s32 0, %v26
  %v28 = vrot.slane %v23, %v27
  %vm30 = vcmask 130048
  %v32 = vsel %vm30, %v20, 0
  %34 = vmatprep.subr.mxu0 0.0
  %35 = vmatpush1.msra.mxu0 %v21
  %36 = vmatprep.subr.mxu0 0.0
  %37 = vmatpush1.msra.mxu0 %v22
  %38 = vmatprep.subr.mxu0 0.0
  %39 = vmatpush1.msra.mxu0 0.0
  %40 = vmatprep.subr.mxu0 0.0
  %41 = vmatpush1.msra.mxu0 0.0
  %42 = vmatprep.subr.mxu0 0.0
  %43 = vmatpush1.msra.mxu0 0.0
  %44 = vmatprep.subr.mxu0 0.0
  %45 = vmatpush1.msra.mxu0 0.0
  %46 = vmatprep.subr.mxu0 0.0
  %47 = vmatpush1.msra.mxu0 0.0
  %48 = vmatprep.subr.mxu0 0.0
  %49 = vmatpush1.msra.mxu0 0.0
  %50 = vmatprep.subr.mxu0 0.0
  %51 = vmatpush1.msra.mxu0 0.0
  %52 = vmatprep.subr.mxu0 0.0
  %53 = vmatpush1.msra.mxu0 0.0
  %54 = vmatprep.subr.mxu0 0.0
  %55 = vmatpush1.msra.mxu0 0.0
  %56 = vmatprep.subr.mxu0 0.0
  %57 = vmatpush1.msra.mxu0 0.0
  %58 = vmatprep.subr.mxu0 0.0
  %59 = vmatpush1.msra.mxu0 0.0
  %60 = vmatprep.subr.mxu0 0.0
  %61 = vmatpush1.msra.mxu0 0.0
  %62 = vmatprep.subr.mxu0 0.0
  %63 = vmatpush1.msra.mxu0 0.0
  %64 = vmatprep.subr.mxu0 0.0
  %65 = vmatpush1.msra.mxu0 0.0
  %66 = vmatprep.subr.mxu0 0.0
  %67 = vmatpush1.msra.mxu0 0.0
  %68 = vmatprep.subr.mxu0 0.0
  %69 = vmatpush1.msra.mxu0 0.0
  %70 = vmatprep.subr.mxu0 0.0
  %71 = vmatpush1.msra.mxu0 0.0
  %72 = vmatprep.subr.mxu0 0.0
  %73 = vmatpush1.msra.mxu0 0.0
  %74 = vmatprep.subr.mxu0 0.0
  %75 = vmatpush1.msra.mxu0 0.0
  %76 = vmatprep.subr.mxu0 0.0
  %77 = vmatpush1.msra.mxu0 0.0
  %78 = vmatprep.subr.mxu0 0.0
  %79 = vmatpush1.msra.mxu0 0.0
  %80 = vmatprep.subr.mxu0 0.0
  %81 = vmatpush1.msra.mxu0 0.0
  %82 = vmatprep.subr.mxu0 0.0
  %83 = vmatpush1.msra.mxu0 0.0
  %84 = vmatprep.subr.mxu0 0.0
  %85 = vmatpush1.msra.mxu0 0.0
  %86 = vmatprep.subr.mxu0 0.0
  %87 = vmatpush1.msra.mxu0 0.0
  %88 = vmatprep.subr.mxu0 0.0
  %89 = vmatpush1.msra.mxu0 0.0
  %90 = vmatprep.subr.mxu0 0.0
  %91 = vmatpush1.msra.mxu0 0.0
  %92 = vmatprep.subr.mxu0 0.0
  %93 = vmatpush1.msra.mxu0 0.0
  %94 = vmatprep.subr.mxu0 0.0
  %95 = vmatpush1.msra.mxu0 0.0
  %96 = vmatprep.subr.mxu0 0.0
  %97 = vmatpush1.msra.mxu0 0.0
  %98 = vmatprep.mubr.f32.mxu0 0.0
  %99 = vmatmul.mubr.f32.gmra.mrb[0].mxu0 %v32
  %v100 = vpop.f32.mrb[0].mxu0
  %v101 = vadd.f32 %v28, %v100
  %v102 = vpop.f32.mrb[0].mxu0
  %103 = vdwg.mxu0
  %v104 = vmax.f32 %v101, 0.0
  %v105 = vld [vmem:[%s3] sm:$0xff]
  %v106 = vld [vmem:[%s3 + $0x8] sm:$0xff]
  %v107 = vld [vmem:[%s3 + $0x10] sm:$0xff]
  %v108 = vld [vmem:[%s3 + $0x18] sm:$0xff]
  %v109 = vld [vmem:[%s3 + $0x20] sm:$0xff]
  %v110 = vld [vmem:[%s3 + $0x28] sm:$0xff]
  %v111 = vld [vmem:[%s3 + $0x30] sm:$0xff]
  %v112 = vld [vmem:[%s3 + $0x38] sm:$0xff]
  %v113 = vld [vmem:[%s3 + $0x40] sm:$0xff]
  %v114 = vld [vmem:[%s3 + $0x48] sm:$0xff]
  %v115 = vld [vmem:[%s3 + $0x50] sm:$0xff]
  %v116 = vld [vmem:[%s3 + $0x58] sm:$0xff]
  %v117 = vld [vmem:[%s3 + $0x60] sm:$0xff]
  %v118 = vld [vmem:[%s3 + $0x68] sm:$0xff]
  %v119 = vld [vmem:[%s3 + $0x70] sm:$0xff]
  %v120 = vld [vmem:[%s3 + $0x78] sm:$0xff]
  %v121 = vld [vmem:[%s4] sm:$0x1]
  %v123 = vlaneseq
  %v124 = vshrl.u32 %v123, 7
  %v125 = vsub.s32 0, %v124
  %v126 = vrot.slane %v121, %v125
  %128 = vmatprep.subr.mxu0 0.0
  %129 = vmatpush1.msra.mxu0 %v105
  %130 = vmatprep.subr.mxu0 0.0
  %131 = vmatpush1.msra.mxu0 %v106
  %132 = vmatprep.subr.mxu0 0.0
  %133 = vmatpush1.msra.mxu0 %v107
  %134 = vmatprep.subr.mxu0 0.0
  %135 = vmatpush1.msra.mxu0 %v108
  %136 = vmatprep.subr.mxu0 0.0
  %137 = vmatpush1.msra.mxu0 %v109
  %138 = vmatprep.subr.mxu0 0.0
  %139 = vmatpush1.msra.mxu0 %v110
  %140 = vmatprep.subr.mxu0 0.0
  %141 = vmatpush1.msra.mxu0 %v111
  %142 = vmatprep.subr.mxu0 0.0
  %143 = vmatpush1.msra.mxu0 %v112
  %144 = vmatprep.subr.mxu0 0.0
  %145 = vmatpush1.msra.mxu0 %v113
  %146 = vmatprep.subr.mxu0 0.0
  %147 = vmatpush1.msra.mxu0 %v114
  %148 = vmatprep.subr.mxu0 0.0
  %149 = vmatpush1.msra.mxu0 %v115
  %150 = vmatprep.subr.mxu0 0.0
  %151 = vmatpush1.msra.mxu0 %v116
  %152 = vmatprep.subr.mxu0 0.0
  %153 = vmatpush1.msra.mxu0 %v117
  %154 = vmatprep.subr.mxu0 0.0
  %155 = vmatpush1.msra.mxu0 %v118
  %156 = vmatprep.subr.mxu0 0.0
  %157 = vmatpush1.msra.mxu0 %v119
  %158 = vmatprep.subr.mxu0 0.0
  %159 = vmatpush1.msra.mxu0 %v120
  %160 = vmatprep.subr.mxu0 0.0
  %161 = vmatpush1.msra.mxu0 0.0
  %162 = vmatprep.subr.mxu0 0.0
  %163 = vmatpush1.msra.mxu0 0.0
  %164 = vmatprep.subr.mxu0 0.0
  %165 = vmatpush1.msra.mxu0 0.0
  %166 = vmatprep.subr.mxu0 0.0
  %167 = vmatpush1.msra.mxu0 0.0
  %168 = vmatprep.subr.mxu0 0.0
  %169 = vmatpush1.msra.mxu0 0.0
  %170 = vmatprep.subr.mxu0 0.0
  %171 = vmatpush1.msra.mxu0 0.0
  %172 = vmatprep.subr.mxu0 0.0
  %173 = vmatpush1.msra.mxu0 0.0
  %174 = vmatprep.subr.mxu0 0.0
  %175 = vmatpush1.msra.mxu0 0.0
  %176 = vmatprep.subr.mxu0 0.0
  %177 = vmatpush1.msra.mxu0 0.0
  %178 = vmatprep.subr.mxu0 0.0
  %179 = vmatpush1.msra.mxu0 0.0
  %180 = vmatprep.subr.mxu0 0.0
  %181 = vmatpush1.msra.mxu0 0.0
  %182 = vmatprep.subr.mxu0 0.0
  %183 = vmatpush1.msra.mxu0 0.0
  %184 = vmatprep.subr.mxu0 0.0
  %185 = vmatpush1.msra.mxu0 0.0
  %186 = vmatprep.subr.mxu0 0.0
  %187 = vmatpush1.msra.mxu0 0.0
  %188 = vmatprep.subr.mxu0 0.0
  %189 = vmatpush1.msra.mxu0 0.0
  %190 = vmatprep.subr.mxu0 0.0
  %191 = vmatpush1.msra.mxu0 0.0
  %192 = vmatprep.mubr.f32.mxu0 0.0
  %193 = vmatmul.mubr.f32.gmra.mrb[0].mxu0 %v104
  %v194 = vpop.f32.mrb[0].mxu0
  %v195 = vadd.f32 %v126, %v194
  %v196 = vpop.f32.mrb[0].mxu0
  %197 = vdwg.mxu0
  %vm198 = vcmask 64512
  %v199 = vsel %vm198, %v195, -inf
  %200 = vmax.xlane.f32.xlu0 %v199
  %v201 = vpop.xlane.xlu0 %200
  %v202 = vsub.f32 %v195, %v201
  %v203 = vmul.f32 %v202, 1.442695
  %v204 = vpow.pop %v203
  %v205 = vsel %vm198, %v204, 0.0
  %206 = vadd.xlane.f32.xlu0 %v205
  %v207 = vpop.xlane.xlu0 %206
  %v208 = vrcp.pop %v207
  %v209 = vmul.f32 %v207, %v208
  %v210 = vsub.f32 2.0, %v209
  %v211 = vmul.f32 %v208, %v210
  %v212 = vmul.f32 %v204, %v211
  %213 = vst.msk [vmem:[%s5] sm:$0xff] %vm198, %v212
  // Predicated region
  $region22: #{policy_forward.1} parent=0 // pred_check
    _
  $region23: #{policy_forward.1} parent=0 // pred_check_branch
    %215 = sbr.rel (0) target = $region25
  $region24: #{policy_forward.1} parent=0 // pred_region
    _
  $region25: #{policy_forward.1} parent=0 // pred_fallthru
    _
  // Predicated region
  $region26: #{policy_forward.1} parent=0 // pred_check
    _
  $region27: #{policy_forward.1} parent=0 // pred_check_branch
    %217 = sbr.rel (0) target = $region29
  $region28: #{policy_forward.1} parent=0 // pred_region
    _
  $region29: #{policy_forward.1} parent=0 // pred_fallthru
    _

</llo_original>
